<compile_context>
chip_gen: v7x
topology: tpu7x:2x2x1
jax: 0.10.0
libtpu: 0.0.40
codegen_flags: <defaults>
</compile_context>

<pallas_src>
import functools

import jax
import jax.numpy as jnp
from jax import lax
from jax.experimental import pallas as pl
from jax.experimental.pallas import tpu as pltpu


def _g2_kernel(idx_ref, xt_ref, out_ref, *, p):
    """One edge tile: accumulate per-node segment sums for this split."""
    t = pl.program_id(1)

    @pl.when(t == 0)
    def _init():
        out_ref[...] = jnp.zeros_like(out_ref)

    te = idx_ref.shape[2]
    h, n_pad = xt_ref.shape
    gdt = xt_ref.dtype

    xt = xt_ref[...]                       # (h, n_pad), gather dtype, resident
    idx = idx_ref[0]                       # (2, te) i32, lane-dense
    row = idx[0:1, :]                      # (1, te)
    col = idx[1:2, :]                      # (1, te)

    # Transposed one-hots via a sublane iota + natural lane broadcast; padded
    # edges carry an out-of-range node id -> all-zero columns (exact no-ops).
    node_iota = lax.broadcasted_iota(jnp.int32, (n_pad, te), 0)
    oh_row_t = (node_iota == row).astype(jnp.float32)          # (n_pad, te)
    oh_col_t = (node_iota == col).astype(jnp.float32)          # (n_pad, te)
    oh_diff_t = (oh_row_t - oh_col_t).astype(gdt)              # {-1,0,1}: exact in bf16

    # Fused gather (single MXU matmul): xd_t[h, e] = X[row_e, h] - X[col_e, h].
    xd_t = jnp.dot(xt, oh_diff_t, preferred_element_type=jnp.float32)   # (h, te) f32

    if p == 2.0:
        pe = xd_t * xd_t                   # |x|^2 == x*x, skip abs
    elif float(p).is_integer() and p >= 1.0:
        ad = jnp.abs(xd_t)
        pe = ad
        for _ in range(int(p) - 1):
            pe = pe * ad
    else:
        pe = jnp.abs(xd_t) ** p

    # Per-edge H-reduction, lane-major: diff_row[0, e] = sum_h pe[h, e].
    ones_h = jnp.ones((1, h), jnp.float32)
    diff_row = jnp.dot(ones_h, pe, preferred_element_type=jnp.float32)  # (1, te)

    # Segment (scatter) sum over edges as an NT matmul with K = te:
    # sums[0, n] = sum_e diff_row[0, e] * oh_row_t[n, e].
    sums = lax.dot_general(diff_row, oh_row_t, (((1,), (1,)), ((), ())),
                           preferred_element_type=jnp.float32)          # (1, n_pad)

    out_ref[...] += sums[None, :, :]


def _round_up(v, m):
    return (v + m - 1) // m * m


def _device_kind():
    try:
        return jax.devices()[0].device_kind.lower()
    except Exception:
        return ""


def _vmem_capacity_bytes():
    try:
        return int(pltpu.get_tpu_info().vmem_capacity_bytes)
    except Exception:
        pass
    kind = _device_kind()
    if "7" in kind:                        # v7x: 64 MiB VMEM per TensorCore
        return 64 * 1024 * 1024
    return 128 * 1024 * 1024               # v4/v5e/v6e: 128 MiB


def _default_n_splits():
    kind = _device_kind()
    # Only v7x has 2 TensorCores per chip; on 1-TC chips a split is just a
    # serial loop with extra padding, so keep it to 1 there.
    for tag in ("v2", "v3", "v4", "v5", "v6"):
        if tag in kind:
            return 1
    return 2


def g2_forward(x, edge_index, p=2.0, *, edge_tile=2048, n_splits=None,
               gather_dtype=jnp.bfloat16):
    """Returns gg with shape (N,), matching the PyTorch module's return."""
    n, h = x.shape
    e = int(edge_index.shape[1])

    if n_splits is None:
        n_splits = _default_n_splits()

    n_pad = _round_up(max(n, 1), 128)                 # lane-dense node axis
    g_bytes = jnp.dtype(gather_dtype).itemsize

    # VMEM budgeting per generation (v7x 64 MiB, v5e/v6e 128 MiB), leaving
    # headroom for the compiler's own scratch.
    vmem_cap = _vmem_capacity_bytes()
    vmem_limit = min(96 << 20, (vmem_cap * 7) // 8)
    budget = min(64 << 20, (vmem_limit * 3) // 4)

    # Fixed cost: resident X^T (double-buffered by the pipeline even with a
    # constant index_map), the output partials block, and slack for temporaries.
    fixed = 2 * (h * n_pad * g_bytes) + 2 * (8 * n_pad * 4) + (4 << 20)
    # Per-edge (lane) working set: sublane iota + two f32 one-hot columns +
    # gather-dtype one-hot + (h, te) diff/|.|^p temporaries + lane-dense index.
    per_edge = (4 + 4 + 4 + g_bytes) * n_pad + 8 * h + 64
    te_cap = (budget - fixed) // per_edge
    te_cap = max(256, (te_cap // 256) * 256)
    te_need = _round_up(max(-(-e // n_splits), 1), 256)
    te = max(256, (min(edge_tile, te_cap, te_need) // 256) * 256)

    tiles_per_split = -(-e // (n_splits * te))
    tiles_total = n_splits * tiles_per_split
    e_pad = tiles_total * te

    row = edge_index[0].astype(jnp.int32)
    col = edge_index[1].astype(jnp.int32)
    pad_e = e_pad - e
    if pad_e:
        fill = jnp.full((pad_e,), n_pad, dtype=jnp.int32)   # out-of-range -> no-op edges
        row_p = jnp.concatenate([row, fill])
        col_p = jnp.concatenate([col, fill])
    else:
        row_p, col_p = row, col
    idx = jnp.stack([row_p.reshape(tiles_total, te),
                     col_p.reshape(tiles_total, te)], axis=1)  # (tiles_total, 2, te)

    # Resident X^T in the gather dtype (halves VMEM/DMA for bf16).
    xt = x.astype(gather_dtype).T                            # (h, n)
    if n_pad > n:
        xt = jnp.pad(xt, ((0, 0), (0, n_pad - n)))

    kernel = functools.partial(_g2_kernel, p=float(p))
    partials = pl.pallas_call(
        kernel,
        out_shape=jax.ShapeDtypeStruct((n_splits, 1, n_pad), jnp.float32),
        grid=(n_splits, tiles_per_split),
        in_specs=[
            pl.BlockSpec((1, 2, te),
                         lambda s, t: (s * tiles_per_split + t, 0, 0)),
            pl.BlockSpec((h, n_pad), lambda s, t: (0, 0)),   # X^T resident
        ],
        out_specs=pl.BlockSpec((1, 1, n_pad), lambda s, t: (s, 0, 0)),
        compiler_params=pltpu.CompilerParams(
            dimension_semantics=("parallel", "arbitrary"),
            vmem_limit_bytes=int(vmem_limit),
        ),
    )(idx, xt)

    # Tiny O(N) epilogue: combine per-split partial sums; counts (out-degree)
    # are X-independent, so compute them once here instead of per tile.
    sums = jnp.sum(partials[:, 0, :], axis=0)[:n]
    counts = jax.ops.segment_sum(jnp.ones((e,), jnp.float32), row, num_segments=n)
    return jnp.tanh(sums / jnp.maximum(counts, 1.0))


def _reference(x, edge_index, p=2.0):
    """Pure-JAX reference of the returned value (mirrors the torch code)."""
    n = x.shape[0]
    row, col = edge_index[0], edge_index[1]
    diff = jnp.sum(jnp.abs(x[row] - x[col]) ** p, axis=-1)
    sums = jax.ops.segment_sum(diff, row, num_segments=n)
    counts = jax.ops.segment_sum(jnp.ones_like(diff), row, num_segments=n)
    return jnp.tanh(sums / jnp.maximum(counts, 1.0))


if __name__ == "__main__":
    key = jax.random.PRNGKey(0)
    k_x, k_e = jax.random.split(key, 2)

    N, H, E = 16, 32, 64          # nodes, hidden features, edges
    x = jax.random.normal(k_x, (N, H), dtype=jnp.float32)
    edge_index = jax.random.randint(k_e, (2, E), 0, N, dtype=jnp.int32)

    # f32 gather path: matches the pure-f32 reference tightly.
    gg32 = g2_forward(x, edge_index, p=2.0, gather_dtype=jnp.float32)
    gg32 = jax.block_until_ready(gg32)
    ref32 = _reference(x, edge_index, p=2.0)
    assert gg32.shape == (N,)
    assert jnp.allclose(gg32, ref32, atol=1e-5, rtol=1e-5), (gg32, ref32)

    # Default bf16-gather path: matches a reference with X quantized to bf16
    # (the one-hot +/-1 values and the f32 accumulation are exact).
    gg = g2_forward(x, edge_index, p=2.0)
    gg = jax.block_until_ready(gg)
    ref_bf = _reference(x.astype(jnp.bfloat16).astype(jnp.float32), edge_index, p=2.0)
    assert gg.shape == (N,)
    assert jnp.allclose(gg, ref_bf, atol=1e-4, rtol=1e-4), (gg, ref_bf)

    print("KERNEL_OK")
</pallas_src>

<mosaic_0001>
module attributes {stable_mosaic.version = 11 : i64} {
  func.func @_g2_kernel(%arg0: i32, %arg1: i32, %arg2: memref<1x2x256xi32, #tpu.memory_space<vmem>>, %arg3: memref<32x128xf32, #tpu.memory_space<vmem>>, %arg4: memref<1x1x128xf32, #tpu.memory_space<vmem>>) attributes {dimension_semantics = [#tpu.dimension_semantics<parallel>, #tpu.dimension_semantics<arbitrary>], iteration_bounds = array<i64: 2, 1>, scalar_prefetch = 0 : i64, scratch_operands = 0 : i64, tpu.core_type = #tpu.core_type<tc>, window_params = [{transform_indices = @transform_0, window_bounds = array<i64: 1, 2, 256>}, {pipeline_mode = #tpu.pipeline_mode<synchronous>, transform_indices = @transform_1, window_bounds = array<i64: 32, 128>}, {transform_indices = @transform_2, window_bounds = array<i64: 1, 1, 128>}]} {
    %c0_i32 = arith.constant 0 : i32
    %0 = arith.cmpi eq, %arg1, %c0_i32 : i32
    %1 = arith.extui %0 : i1 to i32
    %c0_i32_0 = arith.constant 0 : i32
    %2 = arith.cmpi ne, %1, %c0_i32_0 : i32
    scf.if %2 {
      %cst_14 = arith.constant 0.000000e+00 : f32
      %27 = vector.broadcast %cst_14 : f32 to vector<1x1x128xf32>
      %c0_15 = arith.constant 0 : index
      %c0_16 = arith.constant 0 : index
      %c0_17 = arith.constant 0 : index
      %28 = vector.load %arg4[%c0_15, %c0_16, %c0_17] : memref<1x1x128xf32, #tpu.memory_space<vmem>>, vector<1x1x128xf32>
      tpu.vector_store %arg4[%c0_15, %c0_16, %c0_17], %27 {strides = array<i32>} : memref<1x1x128xf32, #tpu.memory_space<vmem>>, vector<1x1x128xf32>,
    } else {
    }
    %c0 = arith.constant 0 : index
    %c0_1 = arith.constant 0 : index
    %3 = vector.load %arg3[%c0, %c0_1] : memref<32x128xf32, #tpu.memory_space<vmem>>, vector<32x128xf32>
    %c0_2 = arith.constant 0 : index
    %c0_3 = arith.constant 0 : index
    %c0_4 = arith.constant 0 : index
    %4 = vector.load %arg2[%c0_2, %c0_3, %c0_4] : memref<1x2x256xi32, #tpu.memory_space<vmem>>, vector<1x2x256xi32>
    %5 = vector.shape_cast %4 : vector<1x2x256xi32> to vector<2x256xi32>
    %6 = vector.extract_strided_slice %5 {offsets = [0, 0], sizes = [1, 256], strides = [1, 1]} : vector<2x256xi32> to vector<1x256xi32>
    %7 = vector.extract_strided_slice %5 {offsets = [1, 0], sizes = [1, 256], strides = [1, 1]} : vector<2x256xi32> to vector<1x256xi32>
    %8 = tpu.iota {dimensions = array<i32: 0>} : vector<128x256xi32>
    %9 = vector.broadcast %6 : vector<1x256xi32> to vector<128x256xi32>
    %10 = arith.cmpi eq, %8, %9 : vector<128x256xi32>
    %11 = arith.extui %10 : vector<128x256xi1> to vector<128x256xi32>
    %12 = arith.sitofp %11 : vector<128x256xi32> to vector<128x256xf32>
    %13 = vector.broadcast %7 : vector<1x256xi32> to vector<128x256xi32>
    %14 = arith.cmpi eq, %8, %13 : vector<128x256xi32>
    %15 = arith.extui %14 : vector<128x256xi1> to vector<128x256xi32>
    %16 = arith.sitofp %15 : vector<128x256xi32> to vector<128x256xf32>
    %17 = arith.subf %12, %16 : vector<128x256xf32>
    %cst = arith.constant dense<0.000000e+00> : vector<32x256xf32>
    %18 = tpu.matmul %3, %17, %cst {dimension_numbers = #tpu.dot_dimension_numbers<[1], [0], [0], [1], [0, 0, 1, 1], [], []>} : vector<32x128xf32>, vector<128x256xf32>, vector<32x256xf32> -> vector<32x256xf32>
    %19 = arith.mulf %18, %18 : vector<32x256xf32>
    %cst_5 = arith.constant 1.000000e+00 : f32
    %20 = vector.broadcast %cst_5 : f32 to vector<1x32xf32>
    %cst_6 = arith.constant dense<0.000000e+00> : vector<1x256xf32>
    %21 = tpu.matmul %20, %19, %cst_6 {dimension_numbers = #tpu.dot_dimension_numbers<[1], [0], [0], [1], [0, 0, 1, 1], [], []>} : vector<1x32xf32>, vector<32x256xf32>, vector<1x256xf32> -> vector<1x256xf32>
    %cst_7 = arith.constant dense<0.000000e+00> : vector<1x128xf32>
    %22 = tpu.matmul %21, %12, %cst_7 {dimension_numbers = #tpu.dot_dimension_numbers<[1], [1], [0], [0], [0, 0, 1, 0], [], []>} : vector<1x256xf32>, vector<128x256xf32>, vector<1x128xf32> -> vector<1x128xf32>
    %c0_8 = arith.constant 0 : index
    %c0_9 = arith.constant 0 : index
    %c0_10 = arith.constant 0 : index
    %23 = vector.load %arg4[%c0_8, %c0_9, %c0_10] : memref<1x1x128xf32, #tpu.memory_space<vmem>>, vector<1x1x128xf32>
    %24 = vector.shape_cast %22 : vector<1x128xf32> to vector<1x1x128xf32>
    %25 = arith.addf %23, %24 : vector<1x1x128xf32>
    %c0_11 = arith.constant 0 : index
    %c0_12 = arith.constant 0 : index
    %c0_13 = arith.constant 0 : index
    %26 = vector.load %arg4[%c0_11, %c0_12, %c0_13] : memref<1x1x128xf32, #tpu.memory_space<vmem>>, vector<1x1x128xf32>
    tpu.vector_store %arg4[%c0_11, %c0_12, %c0_13], %25 {strides = array<i32>} : memref<1x1x128xf32, #tpu.memory_space<vmem>>, vector<1x1x128xf32>,
    return
  }
  func.func @transform_0(%arg0: i32, %arg1: i32) -> (i32, i32, i32) {
    %c1_i32 = arith.constant 1 : i32
    %0 = arith.muli %arg0, %c1_i32 : i32
    %1 = arith.addi %0, %arg1 : i32
    %c0_i32 = arith.constant 0 : i32
    %c0_i32_0 = arith.constant 0 : i32
    %c0_i32_1 = arith.constant 0 : i32
    return %1, %c0_i32, %c0_i32_0 : i32, i32, i32
  }
  func.func @transform_1(%arg0: i32, %arg1: i32) -> (i32, i32) {
    %c0_i32 = arith.constant 0 : i32
    %c0_i32_0 = arith.constant 0 : i32
    %c0_i32_1 = arith.constant 0 : i32
    return %c0_i32, %c0_i32_0 : i32, i32
  }
  func.func @transform_2(%arg0: i32, %arg1: i32) -> (i32, i32, i32) {
    %c0_i32 = arith.constant 0 : i32
    %c0_i32_0 = arith.constant 0 : i32
    %c0_i32_1 = arith.constant 0 : i32
    return %arg0, %c0_i32, %c0_i32_0 : i32, i32, i32
  }
}

</mosaic_0001>

<llo_original>
// kernel: tpu_custom_call.1
$region0: #{tpu_custom_call.1}
  #allocation0 [shape = 'u32[]', space=smem, size = 0x4, offset = 0x4, fixed_abs, tag = 'smem constant byte address 0x4 - core index']
  #allocation1 [shape = 'u32[144,128]{1,0:T(1,128)}', space=vmem, size = 0x12000, scoped, tag = 'internal scratch']
  %s0 = inlined_call_operand.hbm [shape: s32[2,2,256], index: 0, kind: input, shape index: {}]
  %s1 = inlined_call_operand.hbm [shape: f32[32,128], index: 1, kind: input, shape index: {}]
  %s2 = inlined_call_operand.hbm [shape: f32[2,1,128], index: 2, kind: output, shape index: {}]
  %s3 = sld [smem:[#allocation0]]
  $region53: #{tpu_custom_call.1} parent=0
    _
  %s5 = ssub.s32 1, %s3
  %s6 = scalar_select 0, %s5, %s3
  $region1: #{tpu_custom_call.1} parent=0
    #allocation2 [shape = 'u8[4096]{0}', space=vmem, size = 0x1000, scoped, tag = 'input window, operand 0']
    #allocation3 [shape = 's32[2]{0}', space=sflag, size = 0x8, scoped, tag = 'scoped memory for tpu_custom_call.1']
    #allocation4 [shape = 's32[2]{0}', space=sflag, size = 0x8, scoped, tag = 'scoped memory for tpu_custom_call.1']
    #allocation5 [shape = 'u8[16384]{0}', space=vmem, size = 0x4000, scoped, tag = 'input window, operand 1, single buffered']
    #allocation6 [shape = 's32[1]{0}', space=sflag, size = 0x4, scoped, tag = 'scoped memory for tpu_custom_call.1']
    #allocation7 [shape = 'u8[1024]{0}', space=vmem, size = 0x400, scoped, tag = 'output window, operand 0']
    %7 = vsyncpa [#allocation3], 0
    %s8 = scalar_lea.sflag [#allocation3], 1
    %9 = vsyncpa %s8, 0
    %10 = vsyncpa [#allocation6], 0
    %11 = vsyncpa [#allocation4], 0
    %s12 = scalar_lea.sflag [#allocation4], 1
    %13 = vsyncpa %s12, 0
    loop: start=0, step=1, limit=4
    $region2: #{tpu_custom_call.1} parent=1 // loop_pre_header
      _
    $region3: #{tpu_custom_call.1} parent=1 // loop_header
      %s15 = sphi 0, %s19
      %p16 = scmp.ge.s32.totalorder %s15, 4
      %s22 = sphi 0, %s34
      %s23 = sphi 0, %s30
      %s24 = sphi 0, %s22
      %s25 = sphi 0, %s23
      %s26 = sphi 0, %s24
      %s27 = sphi 0, %s25
      %s39 = sphi 0, %s41
      %s42 = sphi 0, %s39
      %s43 = sphi 0, %s42
      %s59 = sphi 0, %s43
      %s63 = sphi 0, %s63
      %s65 = sphi 0, %s63
      %s66 = sphi 0, %s65
      %s80 = sphi 0, %s66
      %s86 = sphi 0, %s88
      %s89 = sphi 0, %s86
      %s90 = sphi 0, %s89
      %s106 = sphi 0, %s90
    $region4: #{tpu_custom_call.1} parent=1 // loop_header_branch
      %18 = sbr.rel (%p16) target = $region8
    $region5: #{tpu_custom_call.1} parent=1 // loop_body
      %s20 = ssub.s32 %s15, 1
      %s21 = ssub.s32 %s15, 2
      %s28 = sadd.s32 1, %s23
      %p29 = scmp.ge.s32.totalorder %s28, 1
      %s30 = scalar_select %p29, 0, %s28
      %s31 = sadd.s32 1, %s22
      %s32 = scalar_select %p29, %s31, %s22
      %p33 = scmp.ge.s32.totalorder %s32, 2
      %s34 = scalar_select %p33, 0, %s32
      %s35 = sadd.s32 %s22, %s23
      %s36 = sadd.s32 %s34, %s30
      %s37 = ssub.s32 %s35, %s36
      %p38 = scmp.eq.s32.totalorder %s37, 0
      %s40 = sadd.s32 %s39, 1
      %s41 = scalar_select %p38, %s39, %s40
      %p44 = pneg %p38
      %p45 = scmp.eq.s32.totalorder %s15, 1
      %p46 = por %p44, %p45
      %p47 = scmp.ne.s32.totalorder %s39, %s42
      %p48 = scmp.eq.s32.totalorder %s15, 0
      %p49 = por %p47, %p48
      %p50 = scmp.ne.s32.totalorder %s39, %s42
      %p51 = scmp.eq.s32.totalorder %s20, 1
      %p52 = por %p50, %p51
      %p53 = scmp.ne.s32.totalorder %s42, %s43
      %p54 = scmp.eq.s32.totalorder %s20, 0
      %p55 = por %p53, %p54
      %p56 = scmp.ne.s32.totalorder %s42, %s43
      %p57 = scmp.eq.s32.totalorder %s21, 1
      %p58 = por %p56, %p57
      %p60 = scmp.ne.s32.totalorder %s43, %s59
      %p61 = scmp.eq.s32.totalorder %s21, 0
      %p62 = por %p60, %p61
      %s64 = sadd.s32 %s63, 1
      %p67 = scmp.eq.s32.totalorder %s15, 1
      %p68 = scmp.ne.s32.totalorder %s63, %s65
      %p69 = scmp.eq.s32.totalorder %s15, 0
      %p70 = por %p68, %p69
      %p71 = scmp.ne.s32.totalorder %s63, %s65
      %p72 = scmp.eq.s32.totalorder %s20, 1
      %p73 = por %p71, %p72
      %p74 = scmp.ne.s32.totalorder %s65, %s66
      %p75 = scmp.eq.s32.totalorder %s20, 0
      %p76 = por %p74, %p75
      %p77 = scmp.ne.s32.totalorder %s65, %s66
      %p78 = scmp.eq.s32.totalorder %s21, 1
      %p79 = por %p77, %p78
      %p81 = scmp.ne.s32.totalorder %s66, %s80
      %p82 = scmp.eq.s32.totalorder %s21, 0
      %p83 = por %p81, %p82
      %s84 = ssub.s32 %s22, %s34
      %p85 = scmp.eq.s32.totalorder %s84, 0
      %s87 = sadd.s32 %s86, 1
      %s88 = scalar_select %p85, %s86, %s87
      %p91 = pneg %p85
      %p92 = scmp.eq.s32.totalorder %s15, 1
      %p93 = por %p91, %p92
      %p94 = scmp.ne.s32.totalorder %s86, %s89
      %p95 = scmp.eq.s32.totalorder %s15, 0
      %p96 = por %p94, %p95
      %p97 = scmp.ne.s32.totalorder %s86, %s89
      %p98 = scmp.eq.s32.totalorder %s20, 1
      %p99 = por %p97, %p98
      %p100 = scmp.ne.s32.totalorder %s89, %s90
      %p101 = scmp.eq.s32.totalorder %s20, 0
      %p102 = por %p100, %p101
      %p103 = scmp.ne.s32.totalorder %s89, %s90
      %p104 = scmp.eq.s32.totalorder %s21, 1
      %p105 = por %p103, %p104
      %p107 = scmp.ne.s32.totalorder %s90, %s106
      %p108 = scmp.eq.s32.totalorder %s21, 0
      %p109 = por %p107, %p108
      %p110 = scmp.le.s32.totalorder 1, %s15
      %p111 = scmp.lt.s32.totalorder %s15, 3
      %p112 = pnand %p110, %p111
      %p113 = pneg %p112
      // Predicated region
      $region9: #{tpu_custom_call.1} parent=5 // pred_check
        _
      $region10: #{tpu_custom_call.1} parent=5 // pred_check_branch
        %115 = sbr.rel (%p112) target = $region12
      $region11: #{tpu_custom_call.1} parent=5 // pred_region
        %s116 = ssub.s32 %s15, 1
        // Predicated region
        $region13: #{tpu_custom_call.1} parent=11 // pred_check
          %p117 = pneg %p76
        $region14: #{tpu_custom_call.1} parent=11 // pred_check_branch
          %119 = sbr.rel (%p117) target = $region16
        $region15: #{tpu_custom_call.1} parent=11 // pred_region
          %s121 = ssub.s32 512, 512
          %122 = vsyncadd [#allocation6], %s121
          %s123 = sshll.u32 [#allocation5], 4
          %s124 = int_to_ptr.vmem [resolvable:$true] %s123
          %129 = dma.hbm_to_vmem [thread:$0]  %s1, 512, %s124, [#allocation6], 128, 128, 8
        $region16: #{tpu_custom_call.1} parent=11 // pred_fallthru
          _
      $region12: #{tpu_custom_call.1} parent=5 // pred_fallthru
        _
      %p130 = scmp.lt.s32.totalorder %s15, 2
      // Predicated region
      $region17: #{tpu_custom_call.1} parent=5 // pred_check
        %p131 = pneg %p130
      $region18: #{tpu_custom_call.1} parent=5 // pred_check_branch
        %133 = sbr.rel (%p131) target = $region20
      $region19: #{tpu_custom_call.1} parent=5 // pred_region
        // Predicated region
        $region21: #{tpu_custom_call.1} parent=19 // pred_check
          %p134 = pneg %p49
        $region22: #{tpu_custom_call.1} parent=19 // pred_check_branch
          %136 = sbr.rel (%p134) target = $region24
        $region23: #{tpu_custom_call.1} parent=19 // pred_region
          %s137 = sand.u32 %s39, 1
          %s138 = scalar_lea.sflag [#allocation3], %s137
          %s139 = sand.u32 %s39, 1
          %s140 = smul.addr %s139, 4
          %s141 = scalar_lea.vmem [#allocation2], %s140
          %s142 = sadd.s32 %s22, %s23
          %s144 = ssub.s32 64, 64
          %145 = vsyncadd %s138, %s144
          %s146 = smul.addr %s142, 2
          %s147 = smul.addr %s146, 32
          %s148 = scalar_lea.hbm %s0, %s147
          %s150 = sshll.u32 %s141, 4
          %s151 = int_to_ptr.vmem [resolvable:$true] %s150
          %153 = dma.hbm_to_vmem [thread:$0]  %s148, 64, %s151, %s138
        $region24: #{tpu_custom_call.1} parent=19 // pred_fallthru
          _
      $region20: #{tpu_custom_call.1} parent=5 // pred_fallthru
        _
      %p154 = scmp.le.s32.totalorder 1, %s15
      %p155 = scmp.lt.s32.totalorder %s15, 3
      %p156 = pnand %p154, %p155
      %p157 = pneg %p156
      // Predicated region
      $region25: #{tpu_custom_call.1} parent=5 // pred_check
        _
      $region26: #{tpu_custom_call.1} parent=5 // pred_check_branch
        %159 = sbr.rel (%p156) target = $region28
      $region27: #{tpu_custom_call.1} parent=5 // pred_region
        %s160 = ssub.s32 %s15, 1
        %s161 = sand.u32 %s42, 1
        %s162 = scalar_lea.sflag [#allocation3], %s161
        %s163 = sand.u32 %s42, 1
        %s164 = smul.addr %s163, 4
        %s165 = scalar_lea.vmem [#allocation2], %s164
        // Predicated region
        $region29: #{tpu_custom_call.1} parent=27 // pred_check
          %p166 = pneg %p55
        $region30: #{tpu_custom_call.1} parent=27 // pred_check_branch
          %168 = sbr.rel (%p166) target = $region32
        $region31: #{tpu_custom_call.1} parent=27 // pred_region
          %169 = dma.done %s162, 64
        $region32: #{tpu_custom_call.1} parent=27 // pred_fallthru
          _
        // Predicated region
        $region33: #{tpu_custom_call.1} parent=27 // pred_check
          %p170 = pneg %p76
        $region34: #{tpu_custom_call.1} parent=27 // pred_check_branch
          %172 = sbr.rel (%p170) target = $region36
        $region35: #{tpu_custom_call.1} parent=27 // pred_region
          %173 = dma.done [#allocation6], 512
        $region36: #{tpu_custom_call.1} parent=27 // pred_fallthru
          _
        %s174 = sand.u32 %s42, 1
        %s175 = scalar_lea.sflag [#allocation3], %s174
        %s176 = sand.u32 %s42, 1
        %s177 = smul.addr %s176, 4
        %s178 = scalar_lea.vmem [#allocation2], %s177
        %p179 = pneg %p55
        %p180 = pneg %p52
        %p181 = pneg %p76
        %p182 = pneg %p73
        %p183 = pneg %p102
        %p184 = pneg %p99
        %s185 = sand.u32 %s89, 1
        %s186 = scalar_lea.sflag [#allocation4], %s185
        %s187 = sand.u32 %s89, 1
        %s188 = scalar_lea.vmem [#allocation7], %s187
        %s189 = sadd.s32 %s24, %s25
        %p190 = scmp.eq.s32.totalorder %s25, 0
        // Predicated region
        $region37: #{tpu_custom_call.1} parent=27 // pred_check
          %p191 = pneg %p190
        $region38: #{tpu_custom_call.1} parent=27 // pred_check_branch
          %193 = sbr.rel (%p191) target = $region40
        $region39: #{tpu_custom_call.1} parent=27 // pred_region
          %194 = vst [vmem:[%s188] sm:$0x1] 0.0
        $region40: #{tpu_custom_call.1} parent=27 // pred_fallthru
          _
        %v195 = vld [vmem:[#allocation5] sm:$0xff]
        %v196 = vld [vmem:[#allocation5 + $0x8] sm:$0xff]
        %v197 = vld [vmem:[#allocation5 + $0x10] sm:$0xff]
        %v198 = vld [vmem:[#allocation5 + $0x18] sm:$0xff]
        %v199 = vld [vmem:[%s165] sm:$0xf]
        %v200 = vlaneseq
        %v201 = vshrl.u32 %v200, 7
        %v202 = vadd.s32 %v201, 8
        %v203 = vadd.s32 %v201, 16
        %v204 = vadd.s32 %v201, 24
        %v205 = vadd.s32 %v201, 32
        %v206 = vadd.s32 %v201, 40
        %v207 = vadd.s32 %v201, 48
        %v208 = vadd.s32 %v201, 56
        %v209 = vadd.s32 %v201, 64
        %v210 = vadd.s32 %v201, 72
        %v211 = vadd.s32 %v201, 80
        %v212 = vadd.s32 %v201, 88
        %v213 = vadd.s32 %v201, 96
        %v214 = vadd.s32 %v201, 104
        %v215 = vadd.s32 %v201, 112
        %v216 = vadd.s32 %v201, 120
        %v217 = vlaneseq
        %v218 = vshrl.u32 %v217, 7
        %v219 = vsub.s32 0, %v218
        %v220 = vrot.slane %v199, %v219
        %v221 = vlaneseq
        %v222 = vshrl.u32 %v221, 7
        %v223 = vsub.s32 2, %v222
        %v224 = vrot.slane %v199, %v223
        %v225 = vlaneseq
        %v226 = vshrl.u32 %v225, 7
        %v227 = vsub.s32 0, %v226
        %v228 = vrot.slane %v220, %v227
        %v229 = vlaneseq
        %v230 = vshrl.u32 %v229, 7
        %v231 = vsub.s32 0, %v230
        %v232 = vrot.slane %v224, %v231
        %vm233 = vcmp.eq.s32.totalorder %v201, %v228
        %vm234 = vcmp.eq.s32.totalorder %v201, %v232
        %vm235 = vcmp.eq.s32.totalorder %v202, %v228
        %vm236 = vcmp.eq.s32.totalorder %v202, %v232
        %vm237 = vcmp.eq.s32.totalorder %v203, %v228
        %vm238 = vcmp.eq.s32.totalorder %v203, %v232
        %vm239 = vcmp.eq.s32.totalorder %v204, %v228
        %vm240 = vcmp.eq.s32.totalorder %v204, %v232
        %vm241 = vcmp.eq.s32.totalorder %v205, %v228
        %vm242 = vcmp.eq.s32.totalorder %v205, %v232
        %vm243 = vcmp.eq.s32.totalorder %v206, %v228
        %vm244 = vcmp.eq.s32.totalorder %v206, %v232
        %vm245 = vcmp.eq.s32.totalorder %v207, %v228
        %vm246 = vcmp.eq.s32.totalorder %v207, %v232
        %vm247 = vcmp.eq.s32.totalorder %v208, %v228
        %vm248 = vcmp.eq.s32.totalorder %v208, %v232
        %vm249 = vcmp.eq.s32.totalorder %v209, %v228
        %vm250 = vcmp.eq.s32.totalorder %v209, %v232
        %vm251 = vcmp.eq.s32.totalorder %v210, %v228
        %vm252 = vcmp.eq.s32.totalorder %v210, %v232
        %vm253 = vcmp.eq.s32.totalorder %v211, %v228
        %vm254 = vcmp.eq.s32.totalorder %v211, %v232
        %vm255 = vcmp.eq.s32.totalorder %v212, %v228
        %vm256 = vcmp.eq.s32.totalorder %v212, %v232
        %vm257 = vcmp.eq.s32.totalorder %v213, %v228
        %vm258 = vcmp.eq.s32.totalorder %v213, %v232
        %vm259 = vcmp.eq.s32.totalorder %v214, %v228
        %vm260 = vcmp.eq.s32.totalorder %v214, %v232
        %vm261 = vcmp.eq.s32.totalorder %v215, %v228
        %vm262 = vcmp.eq.s32.totalorder %v215, %v232
        %vm263 = vcmp.eq.s32.totalorder %v216, %v228
        %vm264 = vcmp.eq.s32.totalorder %v216, %v232
        %v265 = vsel %vm233, 1, 0
        %v266 = vsel %vm234, 1, 0
        %v267 = vsel %vm235, 1, 0
        %v268 = vsel %vm236, 1, 0
        %v269 = vsel %vm237, 1, 0
        %v270 = vsel %vm238, 1, 0
        %v271 = vsel %vm239, 1, 0
        %v272 = vsel %vm240, 1, 0
        %v273 = vsel %vm241, 1, 0
        %v274 = vsel %vm242, 1, 0
        %v275 = vsel %vm243, 1, 0
        %v276 = vsel %vm244, 1, 0
        %v277 = vsel %vm245, 1, 0
        %v278 = vsel %vm246, 1, 0
        %v279 = vsel %vm247, 1, 0
        %v280 = vsel %vm248, 1, 0
        %v281 = vsel %vm249, 1, 0
        %v282 = vsel %vm250, 1, 0
        %v283 = vsel %vm251, 1, 0
        %v284 = vsel %vm252, 1, 0
        %v285 = vsel %vm253, 1, 0
        %v286 = vsel %vm254, 1, 0
        %v287 = vsel %vm255, 1, 0
        %v288 = vsel %vm256, 1, 0
        %v289 = vsel %vm257, 1, 0
        %v290 = vsel %vm258, 1, 0
        %v291 = vsel %vm259, 1, 0
        %v292 = vsel %vm260, 1, 0
        %v293 = vsel %vm261, 1, 0
        %v294 = vsel %vm262, 1, 0
        %v295 = vsel %vm263, 1, 0
        %v296 = vsel %vm264, 1, 0
        %v297 = vcvt.s32.f32 %v265
        %v298 = vcvt.s32.f32 %v266
        %v299 = vcvt.s32.f32 %v267
        %v300 = vcvt.s32.f32 %v268
        %v301 = vcvt.s32.f32 %v269
        %v302 = vcvt.s32.f32 %v270
        %v303 = vcvt.s32.f32 %v271
        %v304 = vcvt.s32.f32 %v272
        %v305 = vcvt.s32.f32 %v273
        %v306 = vcvt.s32.f32 %v274
        %v307 = vcvt.s32.f32 %v275
        %v308 = vcvt.s32.f32 %v276
        %v309 = vcvt.s32.f32 %v277
        %v310 = vcvt.s32.f32 %v278
        %v311 = vcvt.s32.f32 %v279
        %v312 = vcvt.s32.f32 %v280
        %v313 = vcvt.s32.f32 %v281
        %v314 = vcvt.s32.f32 %v282
        %v315 = vcvt.s32.f32 %v283
        %v316 = vcvt.s32.f32 %v284
        %v317 = vcvt.s32.f32 %v285
        %v318 = vcvt.s32.f32 %v286
        %v319 = vcvt.s32.f32 %v287
        %v320 = vcvt.s32.f32 %v288
        %v321 = vcvt.s32.f32 %v289
        %v322 = vcvt.s32.f32 %v290
        %v323 = vcvt.s32.f32 %v291
        %v324 = vcvt.s32.f32 %v292
        %v325 = vcvt.s32.f32 %v293
        %v326 = vcvt.s32.f32 %v294
        %v327 = vcvt.s32.f32 %v295
        %v328 = vcvt.s32.f32 %v296
        %v329 = vlaneseq
        %v330 = vshrl.u32 %v329, 7
        %v331 = vsub.s32 1, %v330
        %v332 = vrot.slane %v199, %v331
        %v333 = vlaneseq
        %v334 = vshrl.u32 %v333, 7
        %v335 = vsub.s32 3, %v334
        %v336 = vrot.slane %v199, %v335
        %v337 = vlaneseq
        %v338 = vshrl.u32 %v337, 7
        %v339 = vsub.s32 1, %v338
        %v340 = vrot.slane %v332, %v339
        %v341 = vlaneseq
        %v342 = vshrl.u32 %v341, 7
        %v343 = vsub.s32 1, %v342
        %v344 = vrot.slane %v336, %v343
        %vm345 = vcmp.eq.s32.totalorder %v201, %v340
        %vm346 = vcmp.eq.s32.totalorder %v201, %v344
        %vm347 = vcmp.eq.s32.totalorder %v202, %v340
        %vm348 = vcmp.eq.s32.totalorder %v202, %v344
        %vm349 = vcmp.eq.s32.totalorder %v203, %v340
        %vm350 = vcmp.eq.s32.totalorder %v203, %v344
        %vm351 = vcmp.eq.s32.totalorder %v204, %v340
        %vm352 = vcmp.eq.s32.totalorder %v204, %v344
        %vm353 = vcmp.eq.s32.totalorder %v205, %v340
        %vm354 = vcmp.eq.s32.totalorder %v205, %v344
        %vm355 = vcmp.eq.s32.totalorder %v206, %v340
        %vm356 = vcmp.eq.s32.totalorder %v206, %v344
        %vm357 = vcmp.eq.s32.totalorder %v207, %v340
        %vm358 = vcmp.eq.s32.totalorder %v207, %v344
        %vm359 = vcmp.eq.s32.totalorder %v208, %v340
        %vm360 = vcmp.eq.s32.totalorder %v208, %v344
        %vm361 = vcmp.eq.s32.totalorder %v209, %v340
        %vm362 = vcmp.eq.s32.totalorder %v209, %v344
        %vm363 = vcmp.eq.s32.totalorder %v210, %v340
        %vm364 = vcmp.eq.s32.totalorder %v210, %v344
        %vm365 = vcmp.eq.s32.totalorder %v211, %v340
        %vm366 = vcmp.eq.s32.totalorder %v211, %v344
        %vm367 = vcmp.eq.s32.totalorder %v212, %v340
        %vm368 = vcmp.eq.s32.totalorder %v212, %v344
        %vm369 = vcmp.eq.s32.totalorder %v213, %v340
        %vm370 = vcmp.eq.s32.totalorder %v213, %v344
        %vm371 = vcmp.eq.s32.totalorder %v214, %v340
        %vm372 = vcmp.eq.s32.totalorder %v214, %v344
        %vm373 = vcmp.eq.s32.totalorder %v215, %v340
        %vm374 = vcmp.eq.s32.totalorder %v215, %v344
        %vm375 = vcmp.eq.s32.totalorder %v216, %v340
        %vm376 = vcmp.eq.s32.totalorder %v216, %v344
        %v377 = vsel %vm345, 1, 0
        %v378 = vsel %vm346, 1, 0
        %v379 = vsel %vm347, 1, 0
        %v380 = vsel %vm348, 1, 0
        %v381 = vsel %vm349, 1, 0
        %v382 = vsel %vm350, 1, 0
        %v383 = vsel %vm351, 1, 0
        %v384 = vsel %vm352, 1, 0
        %v385 = vsel %vm353, 1, 0
        %v386 = vsel %vm354, 1, 0
        %v387 = vsel %vm355, 1, 0
        %v388 = vsel %vm356, 1, 0
        %v389 = vsel %vm357, 1, 0
        %v390 = vsel %vm358, 1, 0
        %v391 = vsel %vm359, 1, 0
        %v392 = vsel %vm360, 1, 0
        %v393 = vsel %vm361, 1, 0
        %v394 = vsel %vm362, 1, 0
        %v395 = vsel %vm363, 1, 0
        %v396 = vsel %vm364, 1, 0
        %v397 = vsel %vm365, 1, 0
        %v398 = vsel %vm366, 1, 0
        %v399 = vsel %vm367, 1, 0
        %v400 = vsel %vm368, 1, 0
        %v401 = vsel %vm369, 1, 0
        %v402 = vsel %vm370, 1, 0
        %v403 = vsel %vm371, 1, 0
        %v404 = vsel %vm372, 1, 0
        %v405 = vsel %vm373, 1, 0
        %v406 = vsel %vm374, 1, 0
        %v407 = vsel %vm375, 1, 0
        %v408 = vsel %vm376, 1, 0
        %v409 = vcvt.s32.f32 %v377
        %v410 = vcvt.s32.f32 %v378
        %v411 = vcvt.s32.f32 %v379
        %v412 = vcvt.s32.f32 %v380
        %v413 = vcvt.s32.f32 %v381
        %v414 = vcvt.s32.f32 %v382
        %v415 = vcvt.s32.f32 %v383
        %v416 = vcvt.s32.f32 %v384
        %v417 = vcvt.s32.f32 %v385
        %v418 = vcvt.s32.f32 %v386
        %v419 = vcvt.s32.f32 %v387
        %v420 = vcvt.s32.f32 %v388
        %v421 = vcvt.s32.f32 %v389
        %v422 = vcvt.s32.f32 %v390
        %v423 = vcvt.s32.f32 %v391
        %v424 = vcvt.s32.f32 %v392
        %v425 = vcvt.s32.f32 %v393
        %v426 = vcvt.s32.f32 %v394
        %v427 = vcvt.s32.f32 %v395
        %v428 = vcvt.s32.f32 %v396
        %v429 = vcvt.s32.f32 %v397
        %v430 = vcvt.s32.f32 %v398
        %v431 = vcvt.s32.f32 %v399
        %v432 = vcvt.s32.f32 %v400
        %v433 = vcvt.s32.f32 %v401
        %v434 = vcvt.s32.f32 %v402
        %v435 = vcvt.s32.f32 %v403
        %v436 = vcvt.s32.f32 %v404
        %v437 = vcvt.s32.f32 %v405
        %v438 = vcvt.s32.f32 %v406
        %v439 = vcvt.s32.f32 %v407
        %v440 = vcvt.s32.f32 %v408
        %v441 = vsub.f32 %v297, %v409
        %v442 = vsub.f32 %v298, %v410
        %v443 = vsub.f32 %v299, %v411
        %v444 = vsub.f32 %v300, %v412
        %v445 = vsub.f32 %v301, %v413
        %v446 = vsub.f32 %v302, %v414
        %v447 = vsub.f32 %v303, %v415
        %v448 = vsub.f32 %v304, %v416
        %v449 = vsub.f32 %v305, %v417
        %v450 = vsub.f32 %v306, %v418
        %v451 = vsub.f32 %v307, %v419
        %v452 = vsub.f32 %v308, %v420
        %v453 = vsub.f32 %v309, %v421
        %v454 = vsub.f32 %v310, %v422
        %v455 = vsub.f32 %v311, %v423
        %v456 = vsub.f32 %v312, %v424
        %v457 = vsub.f32 %v313, %v425
        %v458 = vsub.f32 %v314, %v426
        %v459 = vsub.f32 %v315, %v427
        %v460 = vsub.f32 %v316, %v428
        %v461 = vsub.f32 %v317, %v429
        %v462 = vsub.f32 %v318, %v430
        %v463 = vsub.f32 %v319, %v431
        %v464 = vsub.f32 %v320, %v432
        %v465 = vsub.f32 %v321, %v433
        %v466 = vsub.f32 %v322, %v434
        %v467 = vsub.f32 %v323, %v435
        %v468 = vsub.f32 %v324, %v436
        %v469 = vsub.f32 %v325, %v437
        %v470 = vsub.f32 %v326, %v438
        %v471 = vsub.f32 %v327, %v439
        %v472 = vsub.f32 %v328, %v440
        %473 = vmatprep.subr.mxu0 %v442
        %474 = vmatpush1.msra.mxu0 %v441
        %475 = vmatprep.subr.mxu0 %v444
        %476 = vmatpush1.msra.mxu0 %v443
        %477 = vmatprep.subr.mxu0 %v446
        %478 = vmatpush1.msra.mxu0 %v445
        %479 = vmatprep.subr.mxu0 %v448
        %480 = vmatpush1.msra.mxu0 %v447
        %481 = vmatprep.subr.mxu0 %v450
        %482 = vmatpush1.msra.mxu0 %v449
        %483 = vmatprep.subr.mxu0 %v452
        %484 = vmatpush1.msra.mxu0 %v451
        %485 = vmatprep.subr.mxu0 %v454
        %486 = vmatpush1.msra.mxu0 %v453
        %487 = vmatprep.subr.mxu0 %v456
        %488 = vmatpush1.msra.mxu0 %v455
        %489 = vmatprep.subr.mxu0 %v458
        %490 = vmatpush1.msra.mxu0 %v457
        %491 = vmatprep.subr.mxu0 %v460
        %492 = vmatpush1.msra.mxu0 %v459
        %493 = vmatprep.subr.mxu0 %v462
        %494 = vmatpush1.msra.mxu0 %v461
        %495 = vmatprep.subr.mxu0 %v464
        %496 = vmatpush1.msra.mxu0 %v463
        %497 = vmatprep.subr.mxu0 %v466
        %498 = vmatpush1.msra.mxu0 %v465
        %499 = vmatprep.subr.mxu0 %v468
        %500 = vmatpush1.msra.mxu0 %v467
        %501 = vmatprep.subr.mxu0 %v470
        %502 = vmatpush1.msra.mxu0 %v469
        %503 = vmatprep.subr.mxu0 %v472
        %504 = vmatpush1.msra.mxu0 %v471
        %505 = vmatprep.subr.mxu0 0.0
        %506 = vmatpush1.msra.mxu0 0.0
        %507 = vmatprep.subr.mxu0 0.0
        %508 = vmatpush1.msra.mxu0 0.0
        %509 = vmatprep.subr.mxu0 0.0
        %510 = vmatpush1.msra.mxu0 0.0
        %511 = vmatprep.subr.mxu0 0.0
        %512 = vmatpush1.msra.mxu0 0.0
        %513 = vmatprep.subr.mxu0 0.0
        %514 = vmatpush1.msra.mxu0 0.0
        %515 = vmatprep.subr.mxu0 0.0
        %516 = vmatpush1.msra.mxu0 0.0
        %517 = vmatprep.subr.mxu0 0.0
        %518 = vmatpush1.msra.mxu0 0.0
        %519 = vmatprep.subr.mxu0 0.0
        %520 = vmatpush1.msra.mxu0 0.0
        %521 = vmatprep.subr.mxu0 0.0
        %522 = vmatpush1.msra.mxu0 0.0
        %523 = vmatprep.subr.mxu0 0.0
        %524 = vmatpush1.msra.mxu0 0.0
        %525 = vmatprep.subr.mxu0 0.0
        %526 = vmatpush1.msra.mxu0 0.0
        %527 = vmatprep.subr.mxu0 0.0
        %528 = vmatpush1.msra.mxu0 0.0
        %529 = vmatprep.subr.mxu0 0.0
        %530 = vmatpush1.msra.mxu0 0.0
        %531 = vmatprep.subr.mxu0 0.0
        %532 = vmatpush1.msra.mxu0 0.0
        %533 = vmatprep.subr.mxu0 0.0
        %534 = vmatpush1.msra.mxu0 0.0
        %535 = vmatprep.subr.mxu0 0.0
        %536 = vmatpush1.msra.mxu0 0.0
        %537 = vmatprep.mubr.f32.mxu0 0.0
        %538 = vmatmul.mubr.f32.gmra.mrb[0].mxu0 %v195
        %v539 = vpop.f32.mrb[0].mxu0
        %v540 = vadd.f32 0.0, %v539
        %v541 = vpop.f32.mrb[0].mxu0
        %v542 = vadd.f32 0.0, %v541
        %543 = vmatprep.mubr.f32.mxu0 0.0
        %544 = vmatmul.mubr.f32.gmra.mrb[0].mxu0 %v196
        %v545 = vpop.f32.mrb[0].mxu0
        %v546 = vadd.f32 0.0, %v545
        %v547 = vpop.f32.mrb[0].mxu0
        %v548 = vadd.f32 0.0, %v547
        %549 = vmatprep.mubr.f32.mxu0 0.0
        %550 = vmatmul.mubr.f32.gmra.mrb[0].mxu0 %v197
        %v551 = vpop.f32.mrb[0].mxu0
        %v552 = vadd.f32 0.0, %v551
        %v553 = vpop.f32.mrb[0].mxu0
        %v554 = vadd.f32 0.0, %v553
        %555 = vmatprep.mubr.f32.mxu0 0.0
        %556 = vmatmul.mubr.f32.gmra.mrb[0].mxu0 %v198
        %v557 = vpop.f32.mrb[0].mxu0
        %v558 = vadd.f32 0.0, %v557
        %v559 = vpop.f32.mrb[0].mxu0
        %v560 = vadd.f32 0.0, %v559
        %561 = vdwg.mxu0
        %v562 = vmul.f32 %v540, %v540
        %v563 = vmul.f32 %v542, %v542
        %v564 = vmul.f32 %v546, %v546
        %v565 = vmul.f32 %v548, %v548
        %v566 = vmul.f32 %v552, %v552
        %v567 = vmul.f32 %v554, %v554
        %v568 = vmul.f32 %v558, %v558
        %v569 = vmul.f32 %v560, %v560
        %vm570 = vcmask 261120
        %v572 = vsel %vm570, 1.0, 0
        %574 = vmatprep.subr.mxu0 %v563
        %575 = vmatpush1.msra.mxu0 %v562
        %576 = vmatprep.subr.mxu0 %v565
        %577 = vmatpush1.msra.mxu0 %v564
        %578 = vmatprep.subr.mxu0 %v567
        %579 = vmatpush1.msra.mxu0 %v566
        %580 = vmatprep.subr.mxu0 %v569
        %581 = vmatpush1.msra.mxu0 %v568
        %582 = vmatprep.subr.mxu0 0.0
        %583 = vmatpush1.msra.mxu0 0.0
        %584 = vmatprep.subr.mxu0 0.0
        %585 = vmatpush1.msra.mxu0 0.0
        %586 = vmatprep.subr.mxu0 0.0
        %587 = vmatpush1.msra.mxu0 0.0
        %588 = vmatprep.subr.mxu0 0.0
        %589 = vmatpush1.msra.mxu0 0.0
        %590 = vmatprep.subr.mxu0 0.0
        %591 = vmatpush1.msra.mxu0 0.0
        %592 = vmatprep.subr.mxu0 0.0
        %593 = vmatpush1.msra.mxu0 0.0
        %594 = vmatprep.subr.mxu0 0.0
        %595 = vmatpush1.msra.mxu0 0.0
        %596 = vmatprep.subr.mxu0 0.0
        %597 = vmatpush1.msra.mxu0 0.0
        %598 = vmatprep.subr.mxu0 0.0
        %599 = vmatpush1.msra.mxu0 0.0
        %600 = vmatprep.subr.mxu0 0.0
        %601 = vmatpush1.msra.mxu0 0.0
        %602 = vmatprep.subr.mxu0 0.0
        %603 = vmatpush1.msra.mxu0 0.0
        %604 = vmatprep.subr.mxu0 0.0
        %605 = vmatpush1.msra.mxu0 0.0
        %606 = vmatprep.subr.mxu0 0.0
        %607 = vmatpush1.msra.mxu0 0.0
        %608 = vmatprep.subr.mxu0 0.0
        %609 = vmatpush1.msra.mxu0 0.0
        %610 = vmatprep.subr.mxu0 0.0
        %611 = vmatpush1.msra.mxu0 0.0
        %612 = vmatprep.subr.mxu0 0.0
        %613 = vmatpush1.msra.mxu0 0.0
        %614 = vmatprep.subr.mxu0 0.0
        %615 = vmatpush1.msra.mxu0 0.0
        %616 = vmatprep.subr.mxu0 0.0
        %617 = vmatpush1.msra.mxu0 0.0
        %618 = vmatprep.subr.mxu0 0.0
        %619 = vmatpush1.msra.mxu0 0.0
        %620 = vmatprep.subr.mxu0 0.0
        %621 = vmatpush1.msra.mxu0 0.0
        %622 = vmatprep.subr.mxu0 0.0
        %623 = vmatpush1.msra.mxu0 0.0
        %624 = vmatprep.subr.mxu0 0.0
        %625 = vmatpush1.msra.mxu0 0.0
        %626 = vmatprep.subr.mxu0 0.0
        %627 = vmatpush1.msra.mxu0 0.0
        %628 = vmatprep.subr.mxu0 0.0
        %629 = vmatpush1.msra.mxu0 0.0
        %630 = vmatprep.subr.mxu0 0.0
        %631 = vmatpush1.msra.mxu0 0.0
        %632 = vmatprep.subr.mxu0 0.0
        %633 = vmatpush1.msra.mxu0 0.0
        %634 = vmatprep.subr.mxu0 0.0
        %635 = vmatpush1.msra.mxu0 0.0
        %636 = vmatprep.subr.mxu0 0.0
        %637 = vmatpush1.msra.mxu0 0.0
        %638 = vmatprep.mubr.f32.mxu0 0.0
        %639 = vmatmul.mubr.f32.gmra.mrb[0].mxu0 %v572
        %v640 = vpop.f32.mrb[0].mxu0
        %v641 = vadd.f32 0.0, %v640
        %v642 = vpop.f32.mrb[0].mxu0
        %v643 = vadd.f32 0.0, %v642
        %644 = vdwg.mxu0
        %645 = vmatprep.subr.mxu0 %v298
        %646 = vmatpush1.xpose.msra.mxu0 %v297
        %647 = vmatprep.subr.mxu0 %v300
        %648 = vmatpush1.xpose.msra.mxu0 %v299
        %649 = vmatprep.subr.mxu0 %v302
        %650 = vmatpush1.xpose.msra.mxu0 %v301
        %651 = vmatprep.subr.mxu0 %v304
        %652 = vmatpush1.xpose.msra.mxu0 %v303
        %653 = vmatprep.subr.mxu0 %v306
        %654 = vmatpush1.xpose.msra.mxu0 %v305
        %655 = vmatprep.subr.mxu0 %v308
        %656 = vmatpush1.xpose.msra.mxu0 %v307
        %657 = vmatprep.subr.mxu0 %v310
        %658 = vmatpush1.xpose.msra.mxu0 %v309
        %659 = vmatprep.subr.mxu0 %v312
        %660 = vmatpush1.xpose.msra.mxu0 %v311
        %661 = vmatprep.subr.mxu0 %v314
        %662 = vmatpush1.xpose.msra.mxu0 %v313
        %663 = vmatprep.subr.mxu0 %v316
        %664 = vmatpush1.xpose.msra.mxu0 %v315
        %665 = vmatprep.subr.mxu0 %v318
        %666 = vmatpush1.xpose.msra.mxu0 %v317
        %667 = vmatprep.subr.mxu0 %v320
        %668 = vmatpush1.xpose.msra.mxu0 %v319
        %669 = vmatprep.subr.mxu0 %v322
        %670 = vmatpush1.xpose.msra.mxu0 %v321
        %671 = vmatprep.subr.mxu0 %v324
        %672 = vmatpush1.xpose.msra.mxu0 %v323
        %673 = vmatprep.subr.mxu0 %v326
        %674 = vmatpush1.xpose.msra.mxu0 %v325
        %675 = vmatprep.subr.mxu0 %v328
        %676 = vmatpush1.xpose.msra.mxu0 %v327
        %677 = vmatprep.subr.mxu0 0.0
        %678 = vmatpush1.xpose.msra.mxu0 0.0
        %679 = vmatprep.subr.mxu0 0.0
        %680 = vmatpush1.xpose.msra.mxu0 0.0
        %681 = vmatprep.subr.mxu0 0.0
        %682 = vmatpush1.xpose.msra.mxu0 0.0
        %683 = vmatprep.subr.mxu0 0.0
        %684 = vmatpush1.xpose.msra.mxu0 0.0
        %685 = vmatprep.subr.mxu0 0.0
        %686 = vmatpush1.xpose.msra.mxu0 0.0
        %687 = vmatprep.subr.mxu0 0.0
        %688 = vmatpush1.xpose.msra.mxu0 0.0
        %689 = vmatprep.subr.mxu0 0.0
        %690 = vmatpush1.xpose.msra.mxu0 0.0
        %691 = vmatprep.subr.mxu0 0.0
        %692 = vmatpush1.xpose.msra.mxu0 0.0
        %693 = vmatprep.subr.mxu0 0.0
        %694 = vmatpush1.xpose.msra.mxu0 0.0
        %695 = vmatprep.subr.mxu0 0.0
        %696 = vmatpush1.xpose.msra.mxu0 0.0
        %697 = vmatprep.subr.mxu0 0.0
        %698 = vmatpush1.xpose.msra.mxu0 0.0
        %699 = vmatprep.subr.mxu0 0.0
        %700 = vmatpush1.xpose.msra.mxu0 0.0
        %701 = vmatprep.subr.mxu0 0.0
        %702 = vmatpush1.xpose.msra.mxu0 0.0
        %703 = vmatprep.subr.mxu0 0.0
        %704 = vmatpush1.xpose.msra.mxu0 0.0
        %705 = vmatprep.subr.mxu0 0.0
        %706 = vmatpush1.xpose.msra.mxu0 0.0
        %707 = vmatprep.subr.mxu0 0.0
        %708 = vmatpush1.xpose.msra.mxu0 0.0
        %709 = vmatprep.mubr.f32.mxu0 %v643
        %710 = vmatmul.mubr.f32.gmra.mrb[0].mxu0 %v641
        %v711 = vpop.f32.mrb[0].mxu0
        %v712 = vadd.f32 0.0, %v711
        %v713 = vpop.f32.mrb[0].mxu0
        %714 = vdwg.mxu0
        %v715 = vld [vmem:[%s188] sm:$0x1]
        %v716 = vadd.f32 %v715, %v712
        %717 = vst [vmem:[%s188] sm:$0x1] %v716
        %s718 = sand.u32 %s89, 1
        %s719 = scalar_lea.sflag [#allocation4], %s718
        %s720 = sand.u32 %s89, 1
        %s721 = scalar_lea.vmem [#allocation7], %s720
        // Predicated region
        $region41: #{tpu_custom_call.1} parent=27 // pred_check
          %p722 = pneg %p99
        $region42: #{tpu_custom_call.1} parent=27 // pred_check_branch
          %724 = sbr.rel (%p722) target = $region44
        $region43: #{tpu_custom_call.1} parent=27 // pred_region
          %s726 = ssub.s32 16, 16
          %727 = vsyncadd %s719, %s726
          %s728 = smul.addr %s24, 16
          %s729 = scalar_lea.hbm %s2, %s728
          %s731 = sshll.u32 %s721, 4
          %s732 = int_to_ptr.vmem [resolvable:$true] %s731
          %734 = dma.vmem_to_hbm [thread:$0]  %s732, 16, %s729, %s719
        $region44: #{tpu_custom_call.1} parent=27 // pred_fallthru
          _
      $region28: #{tpu_custom_call.1} parent=5 // pred_fallthru
        _
      %p735 = scmp.le.s32.totalorder 2, %s15
      // Predicated region
      $region45: #{tpu_custom_call.1} parent=5 // pred_check
        %p736 = pneg %p735
      $region46: #{tpu_custom_call.1} parent=5 // pred_check_branch
        %738 = sbr.rel (%p736) target = $region48
      $region47: #{tpu_custom_call.1} parent=5 // pred_region
        %s739 = ssub.s32 %s15, 2
        // Predicated region
        $region49: #{tpu_custom_call.1} parent=47 // pred_check
          %p740 = pneg %p105
        $region50: #{tpu_custom_call.1} parent=47 // pred_check_branch
          %742 = sbr.rel (%p740) target = $region52
        $region51: #{tpu_custom_call.1} parent=47 // pred_region
          %s743 = sand.u32 %s90, 1
          %s744 = scalar_lea.sflag [#allocation4], %s743
          %s745 = sand.u32 %s90, 1
          %s746 = scalar_lea.vmem [#allocation7], %s745
          %747 = dma.done %s744, 16
        $region52: #{tpu_custom_call.1} parent=47 // pred_fallthru
          _
      $region48: #{tpu_custom_call.1} parent=5 // pred_fallthru
        _
    $region6: #{tpu_custom_call.1} parent=1 // loop_footer
      %s19 = sadd.s32 1, %s15
    $region7: #{tpu_custom_call.1} parent=1 // loop_footer_branch
      %14 = sbr.rel target = $region3
    $region8: #{tpu_custom_call.1} parent=1 // loop_exit
      _
    %748 = vsyncpa [#allocation3], 1
    %s749 = scalar_lea.sflag [#allocation3], 1
    %750 = vsyncpa %s749, 1
    %751 = vsyncpa [#allocation6], 1
    %752 = vsyncpa [#allocation4], 1
    %s753 = scalar_lea.sflag [#allocation4], 1
    %754 = vsyncpa %s753, 1

</llo_original>
